<compile_context>
chip_gen: v7x
topology: tpu7x:2x2x1
jax: 0.10.0
libtpu: 0.0.40
codegen_flags: <defaults>
</compile_context>

<pallas_src>
import math

import jax
import jax.numpy as jnp
from jax.experimental import pallas as pl
from jax.experimental.pallas import tpu as pltpu

_PAD = 128  # lane-padded width of each projection half (query / key)


def _make_kernel(pad):
    def kernel(x_ref, w_ref, b_ref, o_ref):
        x = x_ref[...]                                       # (Bt, N, F) f32
        bt, n, f = x.shape
        x_bf = x.astype(jnp.bfloat16)

        # One fused, lane-padded MXU matmul for both projections:
        #   columns [0, pad)     -> query half
        #   columns [pad, 2*pad) -> key half (already scaled by 1/sqrt(s))
        qk = jnp.dot(
            x_bf.reshape(bt * n, f), w_ref[...],
            preferred_element_type=jnp.float32,
        ) + b_ref[...]                                       # (Bt*N, 2*pad) f32

        q = jnp.tanh(qk[:, :pad]).reshape(bt, n, pad)        # padded lanes: tanh(0)=0
        k = qk[:, pad:].reshape(bt, n, pad)                  # padded lanes: 0

        # score[b, j, i] = <key_j, query_i>; transpose folded into the
        # contraction, zero-padded lanes contribute nothing.
        scores = jnp.einsum(
            "bjc,bic->bji",
            k.astype(jnp.bfloat16), q.astype(jnp.bfloat16),
            preferred_element_type=jnp.float32,
        )                                                    # (Bt, N, N) f32

        # Softmax over sources i (numerically stabilized), EUP reciprocal.
        scores = scores - jnp.max(scores, axis=-1, keepdims=True)
        e = jnp.exp(scores)
        attn = e * pl.reciprocal(jnp.sum(e, axis=-1, keepdims=True), approx=True)

        # Weighted message sum over sources; store as a lane-dense (Bt, N*F) slab.
        out = jnp.einsum(
            "bji,bif->bjf", attn.astype(jnp.bfloat16), x_bf,
            preferred_element_type=jnp.float32,
        )                                                    # (Bt, N, F) f32
        o_ref[...] = out.reshape(bt, n * f).astype(o_ref.dtype)

    return kernel


def _pick_block_batch(B):
    # Batch many sets per grid step (amortize ~0.35us/step fixed overhead and
    # fatten each DMA), prefer >=2 grid steps so both v7x TensorCores get work,
    # and keep the block batch a multiple of 8 so the lane-dense 2-D output
    # block obeys the (8, 128) sublane rule.  Tiny batches run in one step
    # (block == full array dims, which is also legal).
    for bt in (64, 32, 16, 8):
        if B % bt == 0 and B // bt >= 2:
            return bt
    return B


def deepset_attention(node_data, wq, bq, wk, bk):
    """node_data: [B, N, F] float32; wq/wk: (F, s); bq/bk: (1, s)."""
    B, N, F = node_data.shape
    s = wq.shape[1]
    inv_dk = 1.0 / math.sqrt(s)
    pad = _PAD

    # Fuse + zero-pad the two tiny projections into one lane-friendly weight:
    #   W = [Wq | 0...0 | Wk/sqrt(s) | 0...0]  of shape (F, 2*pad), bf16 for the MXU.
    # The key projection is linear, so the 1/sqrt(s) score scale folds into it.
    w = jnp.zeros((F, 2 * pad), jnp.float32)
    w = w.at[:, :s].set(wq).at[:, pad:pad + s].set(wk * inv_dk)
    b = jnp.zeros((1, 2 * pad), jnp.float32)
    b = b.at[:, :s].set(bq[0]).at[:, pad:pad + s].set(bk[0] * inv_dk)
    w = w.astype(jnp.bfloat16)

    bt = _pick_block_batch(B)
    grid = (B // bt,)

    out_flat = pl.pallas_call(
        _make_kernel(pad),
        out_shape=jax.ShapeDtypeStruct((B, N * F), node_data.dtype),
        grid_spec=pltpu.PrefetchScalarGridSpec(
            num_scalar_prefetch=0,
            grid=grid,
            in_specs=[
                pl.BlockSpec((bt, N, F), lambda i: (i, 0, 0)),     # Bt sets per step
                pl.BlockSpec((F, 2 * pad), lambda i: (0, 0)),      # fused Wq|Wk (resident)
                pl.BlockSpec((1, 2 * pad), lambda i: (0, 0)),      # fused bq|bk (resident)
            ],
            out_specs=pl.BlockSpec((bt, N * F), lambda i: (i, 0)),  # lane-dense output slab
        ),
        compiler_params=pltpu.CompilerParams(
            dimension_semantics=("parallel",),
        ),
    )(node_data, w, b)

    return out_flat.reshape(B, N, F)


def reference(node_data, wq, bq, wk, bk):
    s = wq.shape[1]
    d_k = math.sqrt(s)
    q = jnp.tanh(node_data @ wq + bq[0])                       # (B, N, s)
    k = node_data @ wk + bk[0]                                 # (B, N, s)
    scores = jnp.einsum("bjs,bis->bji", k, q) / d_k            # dst j, src i
    attn = jax.nn.softmax(scores, axis=-1)
    return jnp.einsum("bji,bif->bjf", attn, node_data)


if __name__ == "__main__":
    key = jax.random.PRNGKey(0)
    B, N, in_features = 2, 8, 32
    small = max(in_features // 10, 1)                          # = max(floor(F/10), 1)

    k1, k2, k3, k4, k5 = jax.random.split(key, 5)
    node_data = jax.random.normal(k1, (B, N, in_features), dtype=jnp.float32)
    # Deterministic synthetic parameters (torch Linear stores (out,in); we store (in,out)).
    wq = 0.1 * jax.random.normal(k2, (in_features, small), dtype=jnp.float32)
    bq = 0.1 * jax.random.normal(k3, (1, small), dtype=jnp.float32)
    wk = 0.1 * jax.random.normal(k4, (in_features, small), dtype=jnp.float32)
    bk = 0.1 * jax.random.normal(k5, (1, small), dtype=jnp.float32)

    out = deepset_attention(node_data, wq, bq, wk, bk)
    out = jax.block_until_ready(out)

    ref = reference(node_data, wq, bq, wk, bk)
    assert out.shape == (B, N, in_features)
    # bf16 MXU operands + approx reciprocal -> loosened tolerance vs. the f32 reference.
    assert jnp.allclose(out, ref, atol=5e-2, rtol=5e-2), "mismatch vs reference"

    print("KERNEL_OK")
</pallas_src>

<mosaic_0001>
module attributes {stable_mosaic.version = 11 : i64} {
  func.func @kernel(%arg0: i32, %arg1: memref<2x8x32xf32, #tpu.memory_space<vmem>>, %arg2: memref<32x256xbf16, #tpu.memory_space<vmem>>, %arg3: memref<1x256xf32, #tpu.memory_space<vmem>>, %arg4: memref<2x256xf32, #tpu.memory_space<vmem>>) attributes {dimension_semantics = [#tpu.dimension_semantics<parallel>], iteration_bounds = array<i64: 1>, scalar_prefetch = 0 : i64, scratch_operands = 0 : i64, tpu.core_type = #tpu.core_type<tc>, window_params = [{transform_indices = @transform_0, window_bounds = array<i64: 2, 8, 32>}, {pipeline_mode = #tpu.pipeline_mode<synchronous>, transform_indices = @transform_1, window_bounds = array<i64: 32, 256>}, {pipeline_mode = #tpu.pipeline_mode<synchronous>, transform_indices = @transform_2, window_bounds = array<i64: 1, 256>}, {transform_indices = @transform_3, window_bounds = array<i64: 2, 256>}]} {
    %c0 = arith.constant 0 : index
    %c0_0 = arith.constant 0 : index
    %c0_1 = arith.constant 0 : index
    %0 = vector.load %arg1[%c0, %c0_0, %c0_1] : memref<2x8x32xf32, #tpu.memory_space<vmem>>, vector<2x8x32xf32>
    %1 = arith.truncf %0 : vector<2x8x32xf32> to vector<2x8x32xbf16>
    %2 = vector.shape_cast %1 : vector<2x8x32xbf16> to vector<16x32xbf16>
    %c0_2 = arith.constant 0 : index
    %c0_3 = arith.constant 0 : index
    %3 = vector.load %arg2[%c0_2, %c0_3] : memref<32x256xbf16, #tpu.memory_space<vmem>>, vector<32x256xbf16>
    %cst = arith.constant dense<0.000000e+00> : vector<16x256xf32>
    %4 = tpu.matmul %2, %3, %cst {dimension_numbers = #tpu.dot_dimension_numbers<[1], [0], [0], [1], [0, 0, 1, 1], [], []>} : vector<16x32xbf16>, vector<32x256xbf16>, vector<16x256xf32> -> vector<16x256xf32>
    %c0_4 = arith.constant 0 : index
    %c0_5 = arith.constant 0 : index
    %5 = vector.load %arg3[%c0_4, %c0_5] : memref<1x256xf32, #tpu.memory_space<vmem>>, vector<1x256xf32>
    %6 = vector.broadcast %5 : vector<1x256xf32> to vector<16x256xf32>
    %7 = arith.addf %4, %6 : vector<16x256xf32>
    %8 = vector.extract_strided_slice %7 {offsets = [0, 0], sizes = [16, 128], strides = [1, 1]} : vector<16x256xf32> to vector<16x128xf32>
    %9 = math.tanh %8 : vector<16x128xf32>
    %10 = vector.shape_cast %9 : vector<16x128xf32> to vector<2x8x128xf32>
    %11 = vector.extract_strided_slice %7 {offsets = [0, 128], sizes = [16, 128], strides = [1, 1]} : vector<16x256xf32> to vector<16x128xf32>
    %12 = vector.shape_cast %11 : vector<16x128xf32> to vector<2x8x128xf32>
    %13 = arith.truncf %12 : vector<2x8x128xf32> to vector<2x8x128xbf16>
    %14 = arith.truncf %10 : vector<2x8x128xf32> to vector<2x8x128xbf16>
    "tpu.trace_start"() <{level = 10 : i32, message = "bjc,bic->bji"}> : () -> ()
    %cst_6 = arith.constant dense<0.000000e+00> : vector<2x8x8xf32>
    %15 = tpu.matmul %13, %14, %cst_6 {dimension_numbers = #tpu.dot_dimension_numbers<[2], [2], [1], [1], [0, 0, 0, 1, 1, 1], [0], [0]>} : vector<2x8x128xbf16>, vector<2x8x128xbf16>, vector<2x8x8xf32> -> vector<2x8x8xf32>
    "tpu.trace_stop"() : () -> ()
    %cst_7 = arith.constant dense<0xFF800000> : vector<2x8xf32>
    %16 = vector.multi_reduction <maximumf>, %15, %cst_7 [2] : vector<2x8x8xf32> to vector<2x8xf32>
    %17 = vector.shape_cast %16 : vector<2x8xf32> to vector<2x8x1xf32>
    %18 = vector.broadcast %17 : vector<2x8x1xf32> to vector<2x8x8xf32>
    %19 = arith.subf %15, %18 : vector<2x8x8xf32>
    %20 = math.exp %19 : vector<2x8x8xf32>
    %cst_8 = arith.constant dense<0.000000e+00> : vector<2x8xf32>
    %21 = vector.multi_reduction <add>, %20, %cst_8 [2] : vector<2x8x8xf32> to vector<2x8xf32>
    %22 = vector.shape_cast %21 : vector<2x8xf32> to vector<2x8x1xf32>
    %23 = tpu.reciprocal %22 {approx = true} : vector<2x8x1xf32> -> vector<2x8x1xf32>
    %24 = vector.broadcast %23 : vector<2x8x1xf32> to vector<2x8x8xf32>
    %25 = arith.mulf %20, %24 : vector<2x8x8xf32>
    %26 = arith.truncf %25 : vector<2x8x8xf32> to vector<2x8x8xbf16>
    "tpu.trace_start"() <{level = 10 : i32, message = "bji,bif->bjf"}> : () -> ()
    %cst_9 = arith.constant dense<0.000000e+00> : vector<2x8x32xf32>
    %27 = tpu.matmul %26, %1, %cst_9 {dimension_numbers = #tpu.dot_dimension_numbers<[2], [1], [1], [2], [0, 0, 0, 1, 1, 2], [0], [0]>} : vector<2x8x8xbf16>, vector<2x8x32xbf16>, vector<2x8x32xf32> -> vector<2x8x32xf32>
    "tpu.trace_stop"() : () -> ()
    %28 = vector.shape_cast %27 : vector<2x8x32xf32> to vector<2x256xf32>
    %c0_10 = arith.constant 0 : index
    %c0_11 = arith.constant 0 : index
    %29 = vector.load %arg4[%c0_10, %c0_11] : memref<2x256xf32, #tpu.memory_space<vmem>>, vector<2x256xf32>
    tpu.vector_store %arg4[%c0_10, %c0_11], %28 {strides = array<i32>} : memref<2x256xf32, #tpu.memory_space<vmem>>, vector<2x256xf32>,
    return
  }
  func.func @transform_0(%arg0: i32) -> (i32, i32, i32) {
    %c0_i32 = arith.constant 0 : i32
    %c0_i32_0 = arith.constant 0 : i32
    %c0_i32_1 = arith.constant 0 : i32
    return %arg0, %c0_i32, %c0_i32_0 : i32, i32, i32
  }
  func.func @transform_1(%arg0: i32) -> (i32, i32) {
    %c0_i32 = arith.constant 0 : i32
    %c0_i32_0 = arith.constant 0 : i32
    %c0_i32_1 = arith.constant 0 : i32
    return %c0_i32, %c0_i32_0 : i32, i32
  }
  func.func @transform_2(%arg0: i32) -> (i32, i32) {
    %c0_i32 = arith.constant 0 : i32
    %c0_i32_0 = arith.constant 0 : i32
    %c0_i32_1 = arith.constant 0 : i32
    return %c0_i32, %c0_i32_0 : i32, i32
  }
  func.func @transform_3(%arg0: i32) -> (i32, i32) {
    %c0_i32 = arith.constant 0 : i32
    %c0_i32_0 = arith.constant 0 : i32
    return %arg0, %c0_i32 : i32, i32
  }
}

</mosaic_0001>

<llo_original>
// kernel: tpu_custom_call.1
$region0: #{tpu_custom_call.1}
  #allocation0 [shape = 'u32[]', space=smem, size = 0x4, offset = 0x4, fixed_abs, tag = 'smem constant byte address 0x4 - core index']
  #allocation1 [shape = 'u32[144,128]{1,0:T(1,128)}', space=vmem, size = 0x12000, scoped, tag = 'internal scratch']
  %s0 = inlined_call_operand.hbm [shape: f32[2,8,32], index: 0, kind: input, shape index: {}]
  %s1 = inlined_call_operand.hbm [shape: bf16[32,256], index: 1, kind: input, shape index: {}]
  %s2 = inlined_call_operand.vmem [shape: f32[1,256], index: 2, kind: input, shape index: {}]
  %s3 = inlined_call_operand.hbm [shape: f32[2,256], index: 3, kind: output, shape index: {}]
  %s4 = sld [smem:[#allocation0]]
  $region30: #{tpu_custom_call.1} parent=0
    _
  %s6 = ssub.s32 1, %s4
  %s7 = scalar_select 0, %s6, %s4
  $region1: #{tpu_custom_call.1} parent=0
    #allocation2 [shape = 'u8[8192]{0}', space=vmem, size = 0x2000, scoped, tag = 'input window, operand 0, single buffered']
    #allocation3 [shape = 's32[1]{0}', space=sflag, size = 0x4, scoped, tag = 'scoped memory for tpu_custom_call.1']
    #allocation4 [shape = 's32[1]{0}', space=sflag, size = 0x4, scoped, tag = 'scoped memory for tpu_custom_call.1']
    #allocation5 [shape = 'u8[16384]{0}', space=vmem, size = 0x4000, scoped, tag = 'input window, operand 1, single buffered']
    #allocation6 [shape = 's32[1]{0}', space=sflag, size = 0x4, scoped, tag = 'scoped memory for tpu_custom_call.1']
    #allocation7 [shape = 'u8[2048]{0}', space=vmem, size = 0x800, scoped, tag = 'output window, operand 0, single buffered']
    %8 = vsyncpa [#allocation3], 0
    %9 = vsyncpa [#allocation6], 0
    %10 = vsyncpa [#allocation4], 0
    // Predicated region
    $region2: #{tpu_custom_call.1} parent=1 // pred_check
      _
    $region3: #{tpu_custom_call.1} parent=1 // pred_check_branch
      %12 = sbr.rel (0) target = $region5
    $region4: #{tpu_custom_call.1} parent=1 // pred_region
      %s14 = ssub.s32 256, 256
      %15 = vsyncadd [#allocation3], %s14
      %s16 = sshll.u32 [#allocation2], 4
      %s17 = int_to_ptr.vmem [resolvable:$true] %s16
      %22 = dma.hbm_to_vmem [thread:$0]  %s0, 256, %s17, [#allocation3], 128, 128, 8
    $region5: #{tpu_custom_call.1} parent=1 // pred_fallthru
      _
    // Predicated region
    $region6: #{tpu_custom_call.1} parent=1 // pred_check
      _
    $region7: #{tpu_custom_call.1} parent=1 // pred_check_branch
      %24 = sbr.rel (0) target = $region9
    $region8: #{tpu_custom_call.1} parent=1 // pred_region
      %s26 = ssub.s32 512, 512
      %27 = vsyncadd [#allocation6], %s26
      %s28 = sshll.u32 [#allocation5], 4
      %s29 = int_to_ptr.vmem [resolvable:$true] %s28
      %34 = dma.hbm_to_vmem [thread:$0]  %s1, 512, %s29, [#allocation6], 128, 128, 8
    $region9: #{tpu_custom_call.1} parent=1 // pred_fallthru
      _
    // Predicated region
    $region10: #{tpu_custom_call.1} parent=1 // pred_check
      _
    $region11: #{tpu_custom_call.1} parent=1 // pred_check_branch
      %36 = sbr.rel (0) target = $region13
    $region12: #{tpu_custom_call.1} parent=1 // pred_region
      _
    $region13: #{tpu_custom_call.1} parent=1 // pred_fallthru
      _
    // Predicated region
    $region14: #{tpu_custom_call.1} parent=1 // pred_check
      _
    $region15: #{tpu_custom_call.1} parent=1 // pred_check_branch
      %38 = sbr.rel (0) target = $region17
    $region16: #{tpu_custom_call.1} parent=1 // pred_region
      %39 = dma.done [#allocation3], 256
    $region17: #{tpu_custom_call.1} parent=1 // pred_fallthru
      _
    // Predicated region
    $region18: #{tpu_custom_call.1} parent=1 // pred_check
      _
    $region19: #{tpu_custom_call.1} parent=1 // pred_check_branch
      %41 = sbr.rel (0) target = $region21
    $region20: #{tpu_custom_call.1} parent=1 // pred_region
      %42 = dma.done [#allocation6], 512
    $region21: #{tpu_custom_call.1} parent=1 // pred_fallthru
      _
    %v44 = vld [vmem:[#allocation2] sm:$0xff]
    %v45 = vld [vmem:[#allocation2 + $0x8] sm:$0xff]
    %v46 = vpack.c.bf16 %v44, %v44
    %v47 = vpack.c.bf16 %v45, %v45
    %v48 = vld [vmem:[#allocation5] sm:$0xff]
    %v49 = vld [vmem:[#allocation5 + $0x8] sm:$0xff]
    %v50 = vld [vmem:[#allocation5 + $0x10] sm:$0xff]
    %v51 = vld [vmem:[#allocation5 + $0x18] sm:$0xff]
    %v52 = vld [vmem:[%s2] sm:$0x3]
    %v54 = vlaneseq
    %v55 = vshrl.u32 %v54, 7
    %v56 = vsub.s32 0, %v55
    %v57 = vrot.slane %v52, %v56
    %v58 = vlaneseq
    %v59 = vshrl.u32 %v58, 7
    %v60 = vsub.s32 1, %v59
    %v61 = vrot.slane %v52, %v60
    %v66 = vunpack.c.l.b16 %v46
    %v67 = vunpack.c.l.b16 %v47
    %v68 = vpack.c.b16 %v67, %v66
    %v73 = vunpack.c.l.b16 %v48
    %v74 = vunpack.c.h.b16 %v48
    %v75 = vunpack.c.l.b16 %v49
    %v76 = vunpack.c.h.b16 %v49
    %v77 = vunpack.c.l.b16 %v50
    %v78 = vunpack.c.h.b16 %v50
    %v79 = vunpack.c.l.b16 %v51
    %v80 = vunpack.c.h.b16 %v51
    %v81 = vpack.c.b16 %v75, %v73
    %v82 = vpack.c.b16 %v76, %v74
    %v83 = vpack.c.b16 %v79, %v77
    %v84 = vpack.c.b16 %v80, %v78
    %vm89 = vcmask 261120
    %v91 = vsel %vm89, %v68, 0
    %93 = vmatprep.subr.bf16.mxu0 %v82
    %94 = vmatpush1.bf16.msra.mxu0 %v81
    %95 = vmatprep.subr.bf16.mxu0 %v84
    %96 = vmatpush1.bf16.msra.mxu0 %v83
    %97 = vmatprep.subr.bf16.mxu0 0
    %98 = vmatpush1.bf16.msra.mxu0 0
    %99 = vmatprep.subr.bf16.mxu0 0
    %100 = vmatpush1.bf16.msra.mxu0 0
    %101 = vmatprep.subr.bf16.mxu0 0
    %102 = vmatpush1.bf16.msra.mxu0 0
    %103 = vmatprep.subr.bf16.mxu0 0
    %104 = vmatpush1.bf16.msra.mxu0 0
    %105 = vmatprep.subr.bf16.mxu0 0
    %106 = vmatpush1.bf16.msra.mxu0 0
    %107 = vmatprep.subr.bf16.mxu0 0
    %108 = vmatpush1.bf16.msra.mxu0 0
    %109 = vmatprep.subr.bf16.mxu0 0
    %110 = vmatpush1.bf16.msra.mxu0 0
    %111 = vmatprep.subr.bf16.mxu0 0
    %112 = vmatpush1.bf16.msra.mxu0 0
    %113 = vmatprep.subr.bf16.mxu0 0
    %114 = vmatpush1.bf16.msra.mxu0 0
    %115 = vmatprep.subr.bf16.mxu0 0
    %116 = vmatpush1.bf16.msra.mxu0 0
    %117 = vmatprep.subr.bf16.mxu0 0
    %118 = vmatpush1.bf16.msra.mxu0 0
    %119 = vmatprep.subr.bf16.mxu0 0
    %120 = vmatpush1.bf16.msra.mxu0 0
    %121 = vmatprep.subr.bf16.mxu0 0
    %122 = vmatpush1.bf16.msra.mxu0 0
    %123 = vmatprep.subr.bf16.mxu0 0
    %124 = vmatpush1.bf16.msra.mxu0 0
    %125 = vmatprep.mubr.bf16.mxu0 0
    %126 = vmatmul.mubr.bf16.gmra.mrb[0].mxu0 %v91
    %v127 = vpop.f32.mrb[0].mxu0
    %v128 = vadd.f32 %v57, %v127
    %v129 = vpop.f32.mrb[0].mxu0
    %v130 = vadd.f32 %v61, %v129
    %v131 = vpop.f32.mrb[0].mxu0
    %v132 = vadd.f32 %v57, %v131
    %v133 = vpop.f32.mrb[0].mxu0
    %v134 = vadd.f32 %v61, %v133
    %135 = vdwg.mxu0
    %v136 = vtanh.pop %v128
    %v137 = vtanh.pop %v132
    %v138 = vpack.c.bf16 %v130, %v130
    %v139 = vpack.c.bf16 %v134, %v134
    %v140 = vpack.c.bf16 %v136, %v136
    %v141 = vpack.c.bf16 %v137, %v137
    %142 = vmatprep.subr.bf16.mxu0 0
    %143 = vmatpush1.bf16.xpose.msra.mxu0 %v140
    %144 = vmatprep.subr.bf16.mxu0 0
    %145 = vmatpush1.bf16.xpose.msra.mxu0 0
    %146 = vmatprep.subr.bf16.mxu0 0
    %147 = vmatpush1.bf16.xpose.msra.mxu0 0
    %148 = vmatprep.subr.bf16.mxu0 0
    %149 = vmatpush1.bf16.xpose.msra.mxu0 0
    %150 = vmatprep.subr.bf16.mxu0 0
    %151 = vmatpush1.bf16.xpose.msra.mxu0 0
    %152 = vmatprep.subr.bf16.mxu0 0
    %153 = vmatpush1.bf16.xpose.msra.mxu0 0
    %154 = vmatprep.subr.bf16.mxu0 0
    %155 = vmatpush1.bf16.xpose.msra.mxu0 0
    %156 = vmatprep.subr.bf16.mxu0 0
    %157 = vmatpush1.bf16.xpose.msra.mxu0 0
    %158 = vmatprep.subr.bf16.mxu0 0
    %159 = vmatpush1.bf16.xpose.msra.mxu0 0
    %160 = vmatprep.subr.bf16.mxu0 0
    %161 = vmatpush1.bf16.xpose.msra.mxu0 0
    %162 = vmatprep.subr.bf16.mxu0 0
    %163 = vmatpush1.bf16.xpose.msra.mxu0 0
    %164 = vmatprep.subr.bf16.mxu0 0
    %165 = vmatpush1.bf16.xpose.msra.mxu0 0
    %166 = vmatprep.subr.bf16.mxu0 0
    %167 = vmatpush1.bf16.xpose.msra.mxu0 0
    %168 = vmatprep.subr.bf16.mxu0 0
    %169 = vmatpush1.bf16.xpose.msra.mxu0 0
    %170 = vmatprep.subr.bf16.mxu0 0
    %171 = vmatpush1.bf16.xpose.msra.mxu0 0
    %172 = vmatprep.subr.bf16.mxu0 0
    %173 = vmatpush1.bf16.xpose.msra.mxu0 0
    %174 = vmatprep.mubr.bf16.mxu0 0
    %175 = vmatmul.mubr.bf16.gmra.mrb[0].mxu0 %v138
    %v176 = vpop.f32.mrb[0].mxu0
    %v177 = vadd.f32 0.0, %v176
    %v178 = vpop.f32.mrb[0].mxu0
    %v179 = vpop.f32.mrb[0].mxu0
    %v180 = vpop.f32.mrb[0].mxu0
    %181 = vdwg.mxu0
    %182 = vmatprep.subr.bf16.mxu0 0
    %183 = vmatpush1.bf16.xpose.msra.mxu0 %v141
    %184 = vmatprep.subr.bf16.mxu0 0
    %185 = vmatpush1.bf16.xpose.msra.mxu0 0
    %186 = vmatprep.subr.bf16.mxu0 0
    %187 = vmatpush1.bf16.xpose.msra.mxu0 0
    %188 = vmatprep.subr.bf16.mxu0 0
    %189 = vmatpush1.bf16.xpose.msra.mxu0 0
    %190 = vmatprep.subr.bf16.mxu0 0
    %191 = vmatpush1.bf16.xpose.msra.mxu0 0
    %192 = vmatprep.subr.bf16.mxu0 0
    %193 = vmatpush1.bf16.xpose.msra.mxu0 0
    %194 = vmatprep.subr.bf16.mxu0 0
    %195 = vmatpush1.bf16.xpose.msra.mxu0 0
    %196 = vmatprep.subr.bf16.mxu0 0
    %197 = vmatpush1.bf16.xpose.msra.mxu0 0
    %198 = vmatprep.subr.bf16.mxu0 0
    %199 = vmatpush1.bf16.xpose.msra.mxu0 0
    %200 = vmatprep.subr.bf16.mxu0 0
    %201 = vmatpush1.bf16.xpose.msra.mxu0 0
    %202 = vmatprep.subr.bf16.mxu0 0
    %203 = vmatpush1.bf16.xpose.msra.mxu0 0
    %204 = vmatprep.subr.bf16.mxu0 0
    %205 = vmatpush1.bf16.xpose.msra.mxu0 0
    %206 = vmatprep.subr.bf16.mxu0 0
    %207 = vmatpush1.bf16.xpose.msra.mxu0 0
    %208 = vmatprep.subr.bf16.mxu0 0
    %209 = vmatpush1.bf16.xpose.msra.mxu0 0
    %210 = vmatprep.subr.bf16.mxu0 0
    %211 = vmatpush1.bf16.xpose.msra.mxu0 0
    %212 = vmatprep.subr.bf16.mxu0 0
    %213 = vmatpush1.bf16.xpose.msra.mxu0 0
    %214 = vmatprep.mubr.bf16.mxu0 0
    %215 = vmatmul.mubr.bf16.gmra.mrb[0].mxu0 %v139
    %v216 = vpop.f32.mrb[0].mxu0
    %v217 = vadd.f32 0.0, %v216
    %v218 = vpop.f32.mrb[0].mxu0
    %v219 = vpop.f32.mrb[0].mxu0
    %v220 = vpop.f32.mrb[0].mxu0
    %221 = vdwg.mxu0
    %vm222 = vcmask 64512
    %v223 = vsel %vm222, %v177, -inf
    %224 = vmax.xlane.f32.xlu0 %v223
    %v225 = vpop.xlane.xlu0 %224
    %v226 = vsel %vm222, %v217, -inf
    %227 = vmax.xlane.f32.xlu0 %v226
    %v228 = vpop.xlane.xlu0 %227
    %v229 = vsub.f32 %v177, %v225
    %v230 = vsub.f32 %v217, %v228
    %v231 = vmul.f32 %v229, 1.442695
    %v232 = vpow.pop %v231
    %v233 = vmul.f32 %v230, 1.442695
    %v234 = vpow.pop %v233
    %v235 = vsel %vm222, %v232, 0.0
    %236 = vadd.xlane.f32.xlu0 %v235
    %v237 = vpop.xlane.xlu0 %236
    %v238 = vsel %vm222, %v234, 0.0
    %239 = vadd.xlane.f32.xlu0 %v238
    %v240 = vpop.xlane.xlu0 %239
    %v241 = vrcp.pop %v237
    %v242 = vrcp.pop %v240
    %v243 = vmul.f32 %v232, %v241
    %v244 = vmul.f32 %v234, %v242
    %v245 = vpack.c.bf16 %v243, %v243
    %v246 = vpack.c.bf16 %v244, %v244
    %v248 = vsel %vm222, %v245, 0
    %vm250 = vcmask 1043456
    %v252 = vsel %vm250, %v46, 0
    %254 = vmatprep.subr.bf16.mxu0 0
    %255 = vmatpush1.bf16.msra.mxu0 %v252
    %256 = vmatprep.subr.bf16.mxu0 0
    %257 = vmatpush1.bf16.msra.mxu0 0
    %258 = vmatprep.subr.bf16.mxu0 0
    %259 = vmatpush1.bf16.msra.mxu0 0
    %260 = vmatprep.subr.bf16.mxu0 0
    %261 = vmatpush1.bf16.msra.mxu0 0
    %262 = vmatprep.subr.bf16.mxu0 0
    %263 = vmatpush1.bf16.msra.mxu0 0
    %264 = vmatprep.subr.bf16.mxu0 0
    %265 = vmatpush1.bf16.msra.mxu0 0
    %266 = vmatprep.subr.bf16.mxu0 0
    %267 = vmatpush1.bf16.msra.mxu0 0
    %268 = vmatprep.subr.bf16.mxu0 0
    %269 = vmatpush1.bf16.msra.mxu0 0
    %270 = vmatprep.subr.bf16.mxu0 0
    %271 = vmatpush1.bf16.msra.mxu0 0
    %272 = vmatprep.subr.bf16.mxu0 0
    %273 = vmatpush1.bf16.msra.mxu0 0
    %274 = vmatprep.subr.bf16.mxu0 0
    %275 = vmatpush1.bf16.msra.mxu0 0
    %276 = vmatprep.subr.bf16.mxu0 0
    %277 = vmatpush1.bf16.msra.mxu0 0
    %278 = vmatprep.subr.bf16.mxu0 0
    %279 = vmatpush1.bf16.msra.mxu0 0
    %280 = vmatprep.subr.bf16.mxu0 0
    %281 = vmatpush1.bf16.msra.mxu0 0
    %282 = vmatprep.subr.bf16.mxu0 0
    %283 = vmatpush1.bf16.msra.mxu0 0
    %284 = vmatprep.subr.bf16.mxu0 0
    %285 = vmatpush1.bf16.msra.mxu0 0
    %286 = vmatprep.mubr.bf16.mxu0 0
    %287 = vmatmul.mubr.bf16.gmra.mrb[0].mxu0 %v248
    %v288 = vpop.f32.mrb[0].mxu0
    %v289 = vadd.f32 0.0, %v288
    %v290 = vpop.f32.mrb[0].mxu0
    %v291 = vpop.f32.mrb[0].mxu0
    %v292 = vpop.f32.mrb[0].mxu0
    %293 = vdwg.mxu0
    %v295 = vsel %vm222, %v246, 0
    %v298 = vsel %vm250, %v47, 0
    %300 = vmatprep.subr.bf16.mxu0 0
    %301 = vmatpush1.bf16.msra.mxu0 %v298
    %302 = vmatprep.subr.bf16.mxu0 0
    %303 = vmatpush1.bf16.msra.mxu0 0
    %304 = vmatprep.subr.bf16.mxu0 0
    %305 = vmatpush1.bf16.msra.mxu0 0
    %306 = vmatprep.subr.bf16.mxu0 0
    %307 = vmatpush1.bf16.msra.mxu0 0
    %308 = vmatprep.subr.bf16.mxu0 0
    %309 = vmatpush1.bf16.msra.mxu0 0
    %310 = vmatprep.subr.bf16.mxu0 0
    %311 = vmatpush1.bf16.msra.mxu0 0
    %312 = vmatprep.subr.bf16.mxu0 0
    %313 = vmatpush1.bf16.msra.mxu0 0
    %314 = vmatprep.subr.bf16.mxu0 0
    %315 = vmatpush1.bf16.msra.mxu0 0
    %316 = vmatprep.subr.bf16.mxu0 0
    %317 = vmatpush1.bf16.msra.mxu0 0
    %318 = vmatprep.subr.bf16.mxu0 0
    %319 = vmatpush1.bf16.msra.mxu0 0
    %320 = vmatprep.subr.bf16.mxu0 0
    %321 = vmatpush1.bf16.msra.mxu0 0
    %322 = vmatprep.subr.bf16.mxu0 0
    %323 = vmatpush1.bf16.msra.mxu0 0
    %324 = vmatprep.subr.bf16.mxu0 0
    %325 = vmatpush1.bf16.msra.mxu0 0
    %326 = vmatprep.subr.bf16.mxu0 0
    %327 = vmatpush1.bf16.msra.mxu0 0
    %328 = vmatprep.subr.bf16.mxu0 0
    %329 = vmatpush1.bf16.msra.mxu0 0
    %330 = vmatprep.subr.bf16.mxu0 0
    %331 = vmatpush1.bf16.msra.mxu0 0
    %332 = vmatprep.mubr.bf16.mxu0 0
    %333 = vmatmul.mubr.bf16.gmra.mrb[0].mxu0 %v295
    %v334 = vpop.f32.mrb[0].mxu0
    %v335 = vadd.f32 0.0, %v334
    %v336 = vpop.f32.mrb[0].mxu0
    %v337 = vpop.f32.mrb[0].mxu0
    %v338 = vpop.f32.mrb[0].mxu0
    %339 = vdwg.mxu0
    %v340 = vcombine.high %v289, 0.0
    %v342 = vunpack.c.l.s4 1983009808
    %v343 = vunpack.c.0.s8 %v342
    %v344 = vlaneseq
    %v345 = vshrl.u32 %v344, 7
    %v346 = vsub.s32 %v343, %v345
    %v347 = vrot.slane %v289, %v346
    %v349 = vunpack.c.l.s4 1983009808
    %v350 = vunpack.c.0.s8 %v349
    %v351 = vlaneseq
    %v352 = vshrl.u32 %v351, 7
    %v353 = vsub.s32 %v350, %v352
    %v354 = vrot.slane %v340, %v353
    %v355 = vcombine.high %v335, 0.0
    %v357 = vunpack.c.l.s4 1983009808
    %v358 = vunpack.c.0.s8 %v357
    %v359 = vlaneseq
    %v360 = vshrl.u32 %v359, 7
    %v361 = vsub.s32 %v358, %v360
    %v362 = vrot.slane %v335, %v361
    %v364 = vunpack.c.l.s4 1983009808
    %v365 = vunpack.c.0.s8 %v364
    %v366 = vlaneseq
    %v367 = vshrl.u32 %v366, 7
    %v368 = vsub.s32 %v365, %v367
    %v369 = vrot.slane %v355, %v368
    %v370 = vcombine.low %v347, %v362
    %v371 = vcombine.high %v347, %v362
    %v373 = vunpack.c.l.s4 1934713408
    %v374 = vunpack.c.0.s8 %v373
    %v375 = vlaneseq
    %v376 = vshrl.u32 %v375, 7
    %v377 = vsub.s32 %v374, %v376
    %v378 = vrot.slane %v370, %v377
    %v380 = vunpack.c.l.s4 1934713408
    %v381 = vunpack.c.0.s8 %v380
    %v382 = vlaneseq
    %v383 = vshrl.u32 %v382, 7
    %v384 = vsub.s32 %v381, %v383
    %v385 = vrot.slane %v371, %v384
    %v386 = vcombine.low %v354, %v369
    %v387 = vcombine.high %v354, %v369
    %v389 = vunpack.c.l.s4 1934713408
    %v390 = vunpack.c.0.s8 %v389
    %v391 = vlaneseq
    %v392 = vshrl.u32 %v391, 7
    %v393 = vsub.s32 %v390, %v392
    %v394 = vrot.slane %v386, %v393
    %v396 = vunpack.c.l.s4 1934713408
    %v397 = vunpack.c.0.s8 %v396
    %v398 = vlaneseq
    %v399 = vshrl.u32 %v398, 7
    %v400 = vsub.s32 %v397, %v399
    %v401 = vrot.slane %v387, %v400
    %v402 = vcombine.high %v378, 0.0
    %v403 = vcombine.high %v385, 0.0
    %v404 = vcombine.high %v394, 0.0
    %v405 = vcombine.high %v401, 0.0
    %407 = vrot.lane.b32.xlu0 %v402, 32
    %v408 = vpop.permute.xlu0 %407
    %411 = vrot.lane.b32.xlu0 %v385, 64
    %v412 = vpop.permute.xlu0 %411
    %415 = vrot.lane.b32.xlu0 %v403, 96
    %v416 = vpop.permute.xlu0 %415
    %419 = vrot.lane.b32.xlu0 %v404, 32
    %v420 = vpop.permute.xlu0 %419
    %423 = vrot.lane.b32.xlu0 %v401, 64
    %v424 = vpop.permute.xlu0 %423
    %427 = vrot.lane.b32.xlu0 %v405, 96
    %v428 = vpop.permute.xlu0 %427
    %v430 = vsel %vm89, %v378, %v408
    %vm431 = vcmask 523264
    %v432 = vsel %vm431, %v430, %v412
    %vm433 = vcmask 785408
    %v434 = vsel %vm433, %v432, %v416
    %v435 = vsel %vm89, %v394, %v420
    %v436 = vsel %vm431, %v435, %v424
    %v437 = vsel %vm433, %v436, %v428
    %v440 = vcombine.low %v434, %v437
    %v442 = vunpack.c.l.s4 1983009808
    %v443 = vunpack.c.0.s8 %v442
    %v444 = vlaneseq
    %v445 = vshrl.u32 %v444, 7
    %v446 = vsub.s32 %v443, %v445
    %v447 = vrot.slane %v440, %v446
    %449 = vst [vmem:[#allocation7] sm:$0xf] %v447
    // Predicated region
    $region22: #{tpu_custom_call.1} parent=1 // pred_check
      _
    $region23: #{tpu_custom_call.1} parent=1 // pred_check_branch
      %451 = sbr.rel (0) target = $region25
    $region24: #{tpu_custom_call.1} parent=1 // pred_region
      %s453 = ssub.s32 64, 64
      %454 = vsyncadd [#allocation4], %s453
      %s456 = sshll.u32 [#allocation7], 4
      %s457 = int_to_ptr.vmem [resolvable:$true] %s456
      %459 = dma.vmem_to_hbm [thread:$0]  %s457, 64, %s3, [#allocation4]
    $region25: #{tpu_custom_call.1} parent=1 // pred_fallthru
      _
    // Predicated region
    $region26: #{tpu_custom_call.1} parent=1 // pred_check
      _
    $region27: #{tpu_custom_call.1} parent=1 // pred_check_branch
      %461 = sbr.rel (0) target = $region29
    $region28: #{tpu_custom_call.1} parent=1 // pred_region
      %462 = dma.done [#allocation4], 64
    $region29: #{tpu_custom_call.1} parent=1 // pred_fallthru
      _
    %463 = vsyncpa [#allocation3], 1
    %464 = vsyncpa [#allocation6], 1
    %465 = vsyncpa [#allocation4], 1

</llo_original>
